<compile_context>
chip_gen: v7x
topology: tpu7x:2x2x1
jax: 0.10.0
libtpu: 0.0.40
codegen_flags: <defaults>
</compile_context>

<pallas_src>
import jax
import jax.numpy as jnp
from jax.experimental import pallas as pl
from jax.experimental.pallas import tpu as pltpu


def _round_up(a, b):
    return pl.cdiv(a, b) * b


def _mlp_kernel(x_ref, w1_ref, w2t_ref, o_ref, acc_ref):
    # x_ref:   [tn, d]   one batch tile (auto double-buffered)
    # w1_ref:  [tm, d]   one hidden-dim chunk of W1
    # w2t_ref: [tm, 1]   matching chunk of W2^T
    # o_ref:   [1, tn]   lane-dense output slab for this batch tile
    # acc_ref: [1, tn]   f32 accumulator over the m grid axis (VMEM scratch)
    mj = pl.program_id(1)

    @pl.when(mj == 0)
    def _init():
        acc_ref[...] = jnp.zeros_like(acc_ref)

    # First Linear on the MXU, transposed so TN (large) sits on lanes:
    #   ht[tm, tn] = W1_chunk[tm, d] . x_tile[tn, d]^T   (contract d on both)
    ht = jax.lax.dot_general(
        w1_ref[...], x_ref[...],
        dimension_numbers=(((1,), (1,)), ((), ())),
        preferred_element_type=jnp.float32,
    )
    ht = jnp.maximum(ht, 0.0)                       # ReLU (exact per m-chunk)

    # Second Linear is an [m]->1 matvec: keep it off the MXU (VPU mul + XLU
    # sublane reduce), accumulated in f32 across m chunks.
    acc_ref[...] += jnp.sum(
        ht * w2t_ref[...].astype(jnp.float32), axis=0, keepdims=True)

    @pl.when(mj == pl.num_programs(1) - 1)
    def _finalize():
        o_ref[...] = acc_ref[...].astype(o_ref.dtype)


def nonconvex_relu(x, w1, w2, *, block_n=8192, block_m=1024,
                   vmem_budget_bytes=24 << 20):
    """Fused y = relu(x @ w1.T) @ w2.T.

    x: [N, d], w1: [m, d], w2: [1, m]  ->  [N, 1] (nn.Linear semantics).

    block_n: target batch rows per grid step (multiple of 128).  Default 8192
      amortizes the fixed per-step pipeline overhead (the dominant cost at
      small d) while staying well inside the ~24 MiB VMEM working-set budget
      used here (safe on v7x's 64 MiB VMEM and v5e/v6e scoped defaults).
    block_m: target hidden units per grid step; W1 is chunked along m so large
      hidden widths never force the full weight matrix / [m, tn] intermediate
      to be VMEM-resident.
    """
    n, d = x.shape
    m, d2 = w1.shape
    assert d2 == d and w2.shape == (1, m)

    bytes_x = jnp.dtype(x.dtype).itemsize
    bytes_w = jnp.dtype(w1.dtype).itemsize
    d_pad = _round_up(d, 128)          # lane padding of the x / W1 blocks in VMEM

    # ---- batch tile (tn): as large as possible, multiple of 128 ----------
    n128 = _round_up(n, 128)
    tn = _round_up(block_n, 128)
    # Keep the double-buffered, lane-padded x tile within ~40% of the budget.
    x_cap_rows = max(128, (int(0.4 * vmem_budget_bytes)
                           // (2 * d_pad * bytes_x)) // 128 * 128)
    tn = min(tn, x_cap_rows, n128)
    # Give both v7x TensorCores work if the batch is big enough for 2 tiles.
    if n128 >= 256 and pl.cdiv(n128, tn) < 2:
        tn = _round_up(pl.cdiv(n128, 2), 128)
    grid_n = pl.cdiv(n128, tn)
    n_pad = grid_n * tn

    # ---- hidden tile (tm): bound W1 chunk + [tm, tn] f32 intermediate ----
    tm = min(_round_up(block_m, 8), _round_up(m, 8))

    def _m_step_bytes(t):
        # double-buffered W1 chunk + f32 [tm, tn] intermediate + W2 chunk
        return 2 * t * d_pad * bytes_w + t * tn * 4 + 2 * t * 128 * 4

    while tm > 8 and _m_step_bytes(tm) > int(0.5 * vmem_budget_bytes):
        tm //= 2
    tm = max(8, (tm // 8) * 8)
    if tm >= m:
        tm = m                          # whole hidden dim in one step
        m_pad = m
    else:
        m_pad = _round_up(m, tm)
    grid_m = m_pad // tm

    # ---- zero-pad: padded batch rows / hidden units contribute exactly 0 ----
    # (relu(x@0)=0 and 0-weight W2 entries; note this relies on bias-free layers)
    x_p = x if n_pad == n else jnp.pad(x, ((0, n_pad - n), (0, 0)))
    w1_p = w1 if m_pad == m else jnp.pad(w1, ((0, m_pad - m), (0, 0)))
    w2t = w2.T                                            # [m, 1]
    w2t_p = w2t if m_pad == m else jnp.pad(w2t, ((0, m_pad - m), (0, 0)))

    out = pl.pallas_call(
        _mlp_kernel,
        out_shape=jax.ShapeDtypeStruct((1, n_pad), x.dtype),
        grid_spec=pltpu.PrefetchScalarGridSpec(
            num_scalar_prefetch=0,
            grid=(grid_n, grid_m),
            in_specs=[
                # x: new batch tile per i (double-buffered), constant across j.
                pl.BlockSpec((tn, d), lambda i, j: (i, 0)),
                # W1 / W2^T: chunked along the hidden (reduction) axis j.
                pl.BlockSpec((tm, d), lambda i, j: (j, 0)),
                pl.BlockSpec((tm, 1), lambda i, j: (j, 0)),
            ],
            # Lane-dense [1, tn] output slab; block index constant across j
            # (accumulator pattern, written on the last j via pl.when).
            out_specs=pl.BlockSpec((1, tn), lambda i, j: (0, i)),
            scratch_shapes=[pltpu.VMEM((1, tn), jnp.float32)],
        ),
        compiler_params=pltpu.CompilerParams(
            # Batch tiles are independent -> shard across v7x's 2 TCs.
            # m axis is a reduction -> "arbitrary".
            dimension_semantics=("parallel", "arbitrary"),
            # Raise v5e's 16 MiB scoped default; still safe on v7x (64 MiB).
            vmem_limit_bytes=max(32 << 20, vmem_budget_bytes + (8 << 20)),
        ),
    )(x_p, w1_p, w2t_p)

    return out[0, :n].reshape(n, 1)


if __name__ == "__main__":
    # Small shapes consistent with the module: batch N=8, d=16, hidden m=32.
    N, d, m = 8, 16, 32

    key = jax.random.PRNGKey(0)
    kx, k1, k2 = jax.random.split(key, 3)

    x = jax.random.normal(kx, (N, d), dtype=jnp.float32)
    # Deterministic parameter init (shapes follow nn.Linear: [out, in]).
    w1 = jax.random.normal(k1, (m, d), dtype=jnp.float32) * (1.0 / jnp.sqrt(d))
    w2 = jax.random.normal(k2, (1, m), dtype=jnp.float32) * (1.0 / jnp.sqrt(m))

    out = nonconvex_relu(x, w1, w2)
    out = jax.block_until_ready(out)

    # Pure-JAX reference check (same math as the PyTorch forward).
    ref = jnp.maximum(x @ w1.T, 0.0) @ w2.T
    assert out.shape == (N, 1)
    assert jnp.allclose(out, ref, atol=2e-5, rtol=2e-5)

    # Exercise the m-tiled accumulator path + multi-tile batch path as well.
    N2, d2_, m2 = 600, 48, 96
    kx2, k12, k22 = jax.random.split(jax.random.PRNGKey(0), 3)
    x2 = jax.random.normal(kx2, (N2, d2_), dtype=jnp.float32)
    w1b = jax.random.normal(k12, (m2, d2_), dtype=jnp.float32) * (1.0 / jnp.sqrt(d2_))
    w2b = jax.random.normal(k22, (1, m2), dtype=jnp.float32) * (1.0 / jnp.sqrt(m2))
    out2 = jax.block_until_ready(nonconvex_relu(x2, w1b, w2b, block_m=32))
    ref2 = jnp.maximum(x2 @ w1b.T, 0.0) @ w2b.T
    assert jnp.allclose(out2, ref2, atol=3e-5, rtol=3e-5)

    print("KERNEL_OK")
</pallas_src>

<mosaic_0001>
module attributes {stable_mosaic.version = 11 : i64} {
  func.func @_mlp_kernel(%arg0: i32, %arg1: i32, %arg2: memref<128x16xf32, #tpu.memory_space<vmem>>, %arg3: memref<32x16xf32, #tpu.memory_space<vmem>>, %arg4: memref<32x1xf32, #tpu.memory_space<vmem>>, %arg5: memref<1x128xf32, #tpu.memory_space<vmem>>, %arg6: memref<1x128xf32, #tpu.memory_space<vmem>>) attributes {dimension_semantics = [#tpu.dimension_semantics<parallel>, #tpu.dimension_semantics<arbitrary>], iteration_bounds = array<i64: 1, 1>, scalar_prefetch = 0 : i64, scratch_operands = 1 : i64, tpu.core_type = #tpu.core_type<tc>, window_params = [{transform_indices = @transform_0, window_bounds = array<i64: 128, 16>}, {transform_indices = @transform_1, window_bounds = array<i64: 32, 16>}, {transform_indices = @transform_2, window_bounds = array<i64: 32, 1>}, {transform_indices = @transform_3, window_bounds = array<i64: 1, 128>}]} {
    %c0_i32 = arith.constant 0 : i32
    %0 = arith.cmpi eq, %arg1, %c0_i32 : i32
    %1 = arith.extui %0 : i1 to i32
    %c0_i32_0 = arith.constant 0 : i32
    %2 = arith.cmpi ne, %1, %c0_i32_0 : i32
    scf.if %2 {
      %cst_14 = arith.constant 0.000000e+00 : f32
      %19 = vector.broadcast %cst_14 : f32 to vector<1x128xf32>
      %c0_15 = arith.constant 0 : index
      %c0_16 = arith.constant 0 : index
      %20 = vector.load %arg6[%c0_15, %c0_16] : memref<1x128xf32, #tpu.memory_space<vmem>>, vector<1x128xf32>
      tpu.vector_store %arg6[%c0_15, %c0_16], %19 {strides = array<i32>} : memref<1x128xf32, #tpu.memory_space<vmem>>, vector<1x128xf32>,
    } else {
    }
    %c0 = arith.constant 0 : index
    %c0_1 = arith.constant 0 : index
    %3 = vector.load %arg3[%c0, %c0_1] : memref<32x16xf32, #tpu.memory_space<vmem>>, vector<32x16xf32>
    %c0_2 = arith.constant 0 : index
    %c0_3 = arith.constant 0 : index
    %4 = vector.load %arg2[%c0_2, %c0_3] : memref<128x16xf32, #tpu.memory_space<vmem>>, vector<128x16xf32>
    %cst = arith.constant dense<0.000000e+00> : vector<32x128xf32>
    %5 = tpu.matmul %3, %4, %cst {dimension_numbers = #tpu.dot_dimension_numbers<[1], [1], [0], [0], [0, 0, 1, 0], [], []>} : vector<32x16xf32>, vector<128x16xf32>, vector<32x128xf32> -> vector<32x128xf32>
    %cst_4 = arith.constant 0.000000e+00 : f32
    %6 = vector.broadcast %cst_4 : f32 to vector<32x128xf32>
    %7 = arith.maximumf %5, %6 : vector<32x128xf32>
    %c0_5 = arith.constant 0 : index
    %c0_6 = arith.constant 0 : index
    %8 = vector.load %arg6[%c0_5, %c0_6] : memref<1x128xf32, #tpu.memory_space<vmem>>, vector<1x128xf32>
    %c0_7 = arith.constant 0 : index
    %c0_8 = arith.constant 0 : index
    %9 = vector.load %arg4[%c0_7, %c0_8] : memref<32x1xf32, #tpu.memory_space<vmem>>, vector<32x1xf32>
    %10 = vector.broadcast %9 : vector<32x1xf32> to vector<32x128xf32>
    %11 = arith.mulf %7, %10 : vector<32x128xf32>
    %cst_9 = arith.constant dense<0.000000e+00> : vector<128xf32>
    %12 = vector.multi_reduction <add>, %11, %cst_9 [0] : vector<32x128xf32> to vector<128xf32>
    %13 = vector.shape_cast %12 : vector<128xf32> to vector<1x128xf32>
    %14 = arith.addf %8, %13 : vector<1x128xf32>
    %c0_10 = arith.constant 0 : index
    %c0_11 = arith.constant 0 : index
    %15 = vector.load %arg6[%c0_10, %c0_11] : memref<1x128xf32, #tpu.memory_space<vmem>>, vector<1x128xf32>
    tpu.vector_store %arg6[%c0_10, %c0_11], %14 {strides = array<i32>} : memref<1x128xf32, #tpu.memory_space<vmem>>, vector<1x128xf32>,
    %c0_i32_12 = arith.constant 0 : i32
    %16 = arith.cmpi eq, %arg1, %c0_i32_12 : i32
    %17 = arith.extui %16 : i1 to i32
    %c0_i32_13 = arith.constant 0 : i32
    %18 = arith.cmpi ne, %17, %c0_i32_13 : i32
    scf.if %18 {
      %c0_14 = arith.constant 0 : index
      %c0_15 = arith.constant 0 : index
      %19 = vector.load %arg6[%c0_14, %c0_15] : memref<1x128xf32, #tpu.memory_space<vmem>>, vector<1x128xf32>
      %c0_16 = arith.constant 0 : index
      %c0_17 = arith.constant 0 : index
      %20 = vector.load %arg5[%c0_16, %c0_17] : memref<1x128xf32, #tpu.memory_space<vmem>>, vector<1x128xf32>
      tpu.vector_store %arg5[%c0_16, %c0_17], %19 {strides = array<i32>} : memref<1x128xf32, #tpu.memory_space<vmem>>, vector<1x128xf32>,
    } else {
    }
    return
  }
  func.func @transform_0(%arg0: i32, %arg1: i32) -> (i32, i32) {
    %c0_i32 = arith.constant 0 : i32
    %c0_i32_0 = arith.constant 0 : i32
    return %arg0, %c0_i32 : i32, i32
  }
  func.func @transform_1(%arg0: i32, %arg1: i32) -> (i32, i32) {
    %c0_i32 = arith.constant 0 : i32
    %c0_i32_0 = arith.constant 0 : i32
    return %arg1, %c0_i32 : i32, i32
  }
  func.func @transform_2(%arg0: i32, %arg1: i32) -> (i32, i32) {
    %c0_i32 = arith.constant 0 : i32
    %c0_i32_0 = arith.constant 0 : i32
    return %arg1, %c0_i32 : i32, i32
  }
  func.func @transform_3(%arg0: i32, %arg1: i32) -> (i32, i32) {
    %c0_i32 = arith.constant 0 : i32
    %c0_i32_0 = arith.constant 0 : i32
    return %c0_i32, %arg0 : i32, i32
  }
}

</mosaic_0001>

<llo_original>
// kernel: tpu_custom_call.1
$region0: #{tpu_custom_call.1}
  #allocation0 [shape = 'u32[]', space=smem, size = 0x4, offset = 0x4, fixed_abs, tag = 'smem constant byte address 0x4 - core index']
  #allocation1 [shape = 'u32[144,128]{1,0:T(1,128)}', space=vmem, size = 0x12000, scoped, tag = 'internal scratch']
  #allocation2 [shape = 'f32[1,128]{1,0:T(1,128)}', space=vmem, size = 0x200, scoped, tag = 'scratch operand']
  %s0 = inlined_call_operand.vmem [shape: f32[128,16], index: 0, kind: input, shape index: {}]
  %s1 = inlined_call_operand.vmem [shape: f32[32,16], index: 1, kind: input, shape index: {}]
  %s2 = inlined_call_operand.vmem [shape: f32[32,1], index: 2, kind: input, shape index: {}]
  %s3 = inlined_call_operand.hbm [shape: f32[1,128], index: 3, kind: output, shape index: {}]
  %s4 = sld [smem:[#allocation0]]
  $region30: #{tpu_custom_call.1} parent=0
    _
  %s6 = ssub.s32 1, %s4
  %s7 = scalar_select 0, %s6, %s4
  $region1: #{tpu_custom_call.1} parent=0
    #allocation3 [shape = 'u8[512]{0}', space=vmem, size = 0x400, scoped, tag = 'output window, operand 0, single buffered']
    #allocation4 [shape = 's32[1]{0}', space=sflag, size = 0x4, scoped, tag = 'scoped memory for tpu_custom_call.1']
    %8 = vsyncpa [#allocation4], 0
    // Predicated region
    $region2: #{tpu_custom_call.1} parent=1 // pred_check
      _
    $region3: #{tpu_custom_call.1} parent=1 // pred_check_branch
      %10 = sbr.rel (0) target = $region5
    $region4: #{tpu_custom_call.1} parent=1 // pred_region
      _
    $region5: #{tpu_custom_call.1} parent=1 // pred_fallthru
      _
    // Predicated region
    $region6: #{tpu_custom_call.1} parent=1 // pred_check
      _
    $region7: #{tpu_custom_call.1} parent=1 // pred_check_branch
      %12 = sbr.rel (0) target = $region9
    $region8: #{tpu_custom_call.1} parent=1 // pred_region
      _
    $region9: #{tpu_custom_call.1} parent=1 // pred_fallthru
      _
    // Predicated region
    $region10: #{tpu_custom_call.1} parent=1 // pred_check
      _
    $region11: #{tpu_custom_call.1} parent=1 // pred_check_branch
      %14 = sbr.rel (0) target = $region13
    $region12: #{tpu_custom_call.1} parent=1 // pred_region
      _
    $region13: #{tpu_custom_call.1} parent=1 // pred_fallthru
      _
    %p15 = scmp.eq.s32.totalorder 0, 0
    // Predicated region
    $region14: #{tpu_custom_call.1} parent=1 // pred_check
      %p16 = pneg %p15
    $region15: #{tpu_custom_call.1} parent=1 // pred_check_branch
      %18 = sbr.rel (%p16) target = $region17
    $region16: #{tpu_custom_call.1} parent=1 // pred_region
      %19 = vst [vmem:[#allocation2] sm:$0x1] 0.0
    $region17: #{tpu_custom_call.1} parent=1 // pred_fallthru
      _
    %v20 = vld [vmem:[%s1] sm:$0xff]
    %v21 = vld [vmem:[%s1 + $0x8] sm:$0xff]
    %v22 = vld [vmem:[%s1 + $0x10] sm:$0xff]
    %v23 = vld [vmem:[%s1 + $0x18] sm:$0xff]
    %v24 = vld [vmem:[%s0] sm:$0xff]
    %v25 = vld [vmem:[%s0 + $0x8] sm:$0xff]
    %v26 = vld [vmem:[%s0 + $0x10] sm:$0xff]
    %v27 = vld [vmem:[%s0 + $0x18] sm:$0xff]
    %v28 = vld [vmem:[%s0 + $0x20] sm:$0xff]
    %v29 = vld [vmem:[%s0 + $0x28] sm:$0xff]
    %v30 = vld [vmem:[%s0 + $0x30] sm:$0xff]
    %v31 = vld [vmem:[%s0 + $0x38] sm:$0xff]
    %v32 = vld [vmem:[%s0 + $0x40] sm:$0xff]
    %v33 = vld [vmem:[%s0 + $0x48] sm:$0xff]
    %v34 = vld [vmem:[%s0 + $0x50] sm:$0xff]
    %v35 = vld [vmem:[%s0 + $0x58] sm:$0xff]
    %v36 = vld [vmem:[%s0 + $0x60] sm:$0xff]
    %v37 = vld [vmem:[%s0 + $0x68] sm:$0xff]
    %v38 = vld [vmem:[%s0 + $0x70] sm:$0xff]
    %v39 = vld [vmem:[%s0 + $0x78] sm:$0xff]
    %vm40 = vcmask 130048
    %v42 = vsel %vm40, %v20, 0
    %v45 = vsel %vm40, %v21, 0
    %v48 = vsel %vm40, %v22, 0
    %v51 = vsel %vm40, %v23, 0
    %v54 = vsel %vm40, %v24, 0
    %v57 = vsel %vm40, %v25, 0
    %v60 = vsel %vm40, %v26, 0
    %v63 = vsel %vm40, %v27, 0
    %v66 = vsel %vm40, %v28, 0
    %v69 = vsel %vm40, %v29, 0
    %v72 = vsel %vm40, %v30, 0
    %v75 = vsel %vm40, %v31, 0
    %v78 = vsel %vm40, %v32, 0
    %v81 = vsel %vm40, %v33, 0
    %v84 = vsel %vm40, %v34, 0
    %v87 = vsel %vm40, %v35, 0
    %v90 = vsel %vm40, %v36, 0
    %v93 = vsel %vm40, %v37, 0
    %v96 = vsel %vm40, %v38, 0
    %v99 = vsel %vm40, %v39, 0
    %101 = vmatprep.subr.mxu0 0.0
    %102 = vmatpush1.xpose.msra.mxu0 %v54
    %103 = vmatprep.subr.mxu0 0.0
    %104 = vmatpush1.xpose.msra.mxu0 %v57
    %105 = vmatprep.subr.mxu0 0.0
    %106 = vmatpush1.xpose.msra.mxu0 %v60
    %107 = vmatprep.subr.mxu0 0.0
    %108 = vmatpush1.xpose.msra.mxu0 %v63
    %109 = vmatprep.subr.mxu0 0.0
    %110 = vmatpush1.xpose.msra.mxu0 %v66
    %111 = vmatprep.subr.mxu0 0.0
    %112 = vmatpush1.xpose.msra.mxu0 %v69
    %113 = vmatprep.subr.mxu0 0.0
    %114 = vmatpush1.xpose.msra.mxu0 %v72
    %115 = vmatprep.subr.mxu0 0.0
    %116 = vmatpush1.xpose.msra.mxu0 %v75
    %117 = vmatprep.subr.mxu0 0.0
    %118 = vmatpush1.xpose.msra.mxu0 %v78
    %119 = vmatprep.subr.mxu0 0.0
    %120 = vmatpush1.xpose.msra.mxu0 %v81
    %121 = vmatprep.subr.mxu0 0.0
    %122 = vmatpush1.xpose.msra.mxu0 %v84
    %123 = vmatprep.subr.mxu0 0.0
    %124 = vmatpush1.xpose.msra.mxu0 %v87
    %125 = vmatprep.subr.mxu0 0.0
    %126 = vmatpush1.xpose.msra.mxu0 %v90
    %127 = vmatprep.subr.mxu0 0.0
    %128 = vmatpush1.xpose.msra.mxu0 %v93
    %129 = vmatprep.subr.mxu0 0.0
    %130 = vmatpush1.xpose.msra.mxu0 %v96
    %131 = vmatprep.subr.mxu0 0.0
    %132 = vmatpush1.xpose.msra.mxu0 %v99
    %133 = vmatprep.subr.mxu0 0.0
    %134 = vmatpush1.xpose.msra.mxu0 0.0
    %135 = vmatprep.subr.mxu0 0.0
    %136 = vmatpush1.xpose.msra.mxu0 0.0
    %137 = vmatprep.subr.mxu0 0.0
    %138 = vmatpush1.xpose.msra.mxu0 0.0
    %139 = vmatprep.subr.mxu0 0.0
    %140 = vmatpush1.xpose.msra.mxu0 0.0
    %141 = vmatprep.subr.mxu0 0.0
    %142 = vmatpush1.xpose.msra.mxu0 0.0
    %143 = vmatprep.subr.mxu0 0.0
    %144 = vmatpush1.xpose.msra.mxu0 0.0
    %145 = vmatprep.subr.mxu0 0.0
    %146 = vmatpush1.xpose.msra.mxu0 0.0
    %147 = vmatprep.subr.mxu0 0.0
    %148 = vmatpush1.xpose.msra.mxu0 0.0
    %149 = vmatprep.subr.mxu0 0.0
    %150 = vmatpush1.xpose.msra.mxu0 0.0
    %151 = vmatprep.subr.mxu0 0.0
    %152 = vmatpush1.xpose.msra.mxu0 0.0
    %153 = vmatprep.subr.mxu0 0.0
    %154 = vmatpush1.xpose.msra.mxu0 0.0
    %155 = vmatprep.subr.mxu0 0.0
    %156 = vmatpush1.xpose.msra.mxu0 0.0
    %157 = vmatprep.subr.mxu0 0.0
    %158 = vmatpush1.xpose.msra.mxu0 0.0
    %159 = vmatprep.subr.mxu0 0.0
    %160 = vmatpush1.xpose.msra.mxu0 0.0
    %161 = vmatprep.subr.mxu0 0.0
    %162 = vmatpush1.xpose.msra.mxu0 0.0
    %163 = vmatprep.subr.mxu0 0.0
    %164 = vmatpush1.xpose.msra.mxu0 0.0
    %165 = vmatprep.mubr.f32.mxu0 0.0
    %166 = vmatmul.mubr.f32.gmra.mrb[0].mxu0 %v42
    %v167 = vpop.f32.mrb[0].mxu0
    %v168 = vadd.f32 0.0, %v167
    %v169 = vpop.f32.mrb[0].mxu0
    %170 = vmatprep.mubr.f32.mxu0 0.0
    %171 = vmatmul.mubr.f32.gmra.mrb[0].mxu0 %v45
    %v172 = vpop.f32.mrb[0].mxu0
    %v173 = vadd.f32 0.0, %v172
    %v174 = vpop.f32.mrb[0].mxu0
    %175 = vmatprep.mubr.f32.mxu0 0.0
    %176 = vmatmul.mubr.f32.gmra.mrb[0].mxu0 %v48
    %v177 = vpop.f32.mrb[0].mxu0
    %v178 = vadd.f32 0.0, %v177
    %v179 = vpop.f32.mrb[0].mxu0
    %180 = vmatprep.mubr.f32.mxu0 0.0
    %181 = vmatmul.mubr.f32.gmra.mrb[0].mxu0 %v51
    %v182 = vpop.f32.mrb[0].mxu0
    %v183 = vadd.f32 0.0, %v182
    %v184 = vpop.f32.mrb[0].mxu0
    %185 = vdwg.mxu0
    %v186 = vmax.f32 %v168, 0.0
    %v187 = vmax.f32 %v173, 0.0
    %v188 = vmax.f32 %v178, 0.0
    %v189 = vmax.f32 %v183, 0.0
    %v190 = vld [vmem:[#allocation2] sm:$0x1]
    %v191 = vld [vmem:[%s2] sm:$0xff]
    %v192 = vld [vmem:[%s2 + $0x8] sm:$0xff]
    %v193 = vld [vmem:[%s2 + $0x10] sm:$0xff]
    %v194 = vld [vmem:[%s2 + $0x18] sm:$0xff]
    %196 = vset.pattern.permute.xlu0 0
    %197 = vperm.xlu0 %196, %v191
    %v198 = vpop.permute.xlu0 %197
    %201 = vset.pattern.permute.xlu0 0
    %202 = vperm.xlu0 %201, %v192
    %v203 = vpop.permute.xlu0 %202
    %206 = vset.pattern.permute.xlu0 0
    %207 = vperm.xlu0 %206, %v193
    %v208 = vpop.permute.xlu0 %207
    %211 = vset.pattern.permute.xlu0 0
    %212 = vperm.xlu0 %211, %v194
    %v213 = vpop.permute.xlu0 %212
    %v215 = vmul.f32 %v186, %v198
    %v216 = vmul.f32 %v187, %v203
    %v217 = vmul.f32 %v188, %v208
    %v218 = vmul.f32 %v189, %v213
    %v219 = vadd.f32 %v215, %v216
    %v220 = vadd.f32 %v219, %v217
    %v221 = vadd.f32 %v220, %v218
    %v222 = vrot.slane %v221, 4
    %v223 = vadd.f32 %v221, %v222
    %v224 = vrot.slane %v223, 2
    %v225 = vadd.f32 %v223, %v224
    %v226 = vrot.slane %v225, 1
    %v227 = vadd.f32 %v225, %v226
    %v228 = vadd.f32 %v190, %v227
    %229 = vst [vmem:[#allocation2] sm:$0x1] %v228
    // Predicated region
    $region18: #{tpu_custom_call.1} parent=1 // pred_check
      %p230 = pneg %p15
    $region19: #{tpu_custom_call.1} parent=1 // pred_check_branch
      %232 = sbr.rel (%p230) target = $region21
    $region20: #{tpu_custom_call.1} parent=1 // pred_region
      %v233 = vld [vmem:[#allocation2] sm:$0x1]
      %234 = vst [vmem:[#allocation3] sm:$0x1] %v233
    $region21: #{tpu_custom_call.1} parent=1 // pred_fallthru
      _
    // Predicated region
    $region22: #{tpu_custom_call.1} parent=1 // pred_check
      _
    $region23: #{tpu_custom_call.1} parent=1 // pred_check_branch
      %236 = sbr.rel (0) target = $region25
    $region24: #{tpu_custom_call.1} parent=1 // pred_region
      %s238 = ssub.s32 16, 16
      %239 = vsyncadd [#allocation4], %s238
      %s241 = sshll.u32 [#allocation3], 4
      %s242 = int_to_ptr.vmem [resolvable:$true] %s241
      %244 = dma.vmem_to_hbm [thread:$0]  %s242, 16, %s3, [#allocation4]
    $region25: #{tpu_custom_call.1} parent=1 // pred_fallthru
      _
    // Predicated region
    $region26: #{tpu_custom_call.1} parent=1 // pred_check
      _
    $region27: #{tpu_custom_call.1} parent=1 // pred_check_branch
      %246 = sbr.rel (0) target = $region29
    $region28: #{tpu_custom_call.1} parent=1 // pred_region
      %247 = dma.done [#allocation4], 16
    $region29: #{tpu_custom_call.1} parent=1 // pred_fallthru
      _
    %248 = vsyncpa [#allocation4], 1

</llo_original>
